<compile_context>
chip_gen: v5e
topology: v5e:2x2
jax: 0.10.0
libtpu: 0.0.40
codegen_flags: <defaults>
</compile_context>

<pallas_src>
import functools

import jax
import jax.numpy as jnp
from jax.experimental import pallas as pl
from jax.experimental.pallas import tpu as pltpu


def stats_pool_kernel(x_ref, out_ref, *, inv_t, floor):
    # x_ref: (TB, L, D) block of the input; out_ref: (TB, 2*D).
    x = x_ref[...].astype(jnp.float32)                 # explicit f32 accumulation

    # mean over the time axis (dim=1)
    mean = jnp.mean(x, axis=1)                         # (TB, D)

    # sum of squared residuals over time, clamped, scaled by 1/t, sqrt
    resid = x - mean[:, None, :]                       # (TB, L, D)
    numerator = jnp.sum(resid * resid, axis=1)         # (TB, D)
    std = jnp.sqrt(jnp.maximum(numerator, floor) * inv_t)

    # single lane-dense store of [mean | std]  -> (TB, 2*D)
    out = jnp.concatenate([mean, std], axis=-1)
    out_ref[...] = out.astype(out_ref.dtype)


def stats_pool_forward(x, *, floor=1e-10, bessel=False, block_b=None):
    """x: (B, L, D). Returns (B, 2*D) = concat([mean_over_L, std_over_L], -1)."""
    B, L, D = x.shape
    t = L - 1 if bessel else L

    # Batch block: prefer a sublane-aligned (multiple of 8) divisor of B so the
    # (TB, 2D) output block satisfies the (8, 128) rule; otherwise take the
    # full batch (block == full array dim is always legal).
    if block_b is None:
        block_b = B
        for cand in (64, 32, 16, 8):
            if B % cand == 0:
                block_b = cand
                break
    assert B % block_b == 0, "block_b must divide B"

    kernel = functools.partial(
        stats_pool_kernel, inv_t=1.0 / float(t), floor=float(floor)
    )

    itemsize = jnp.dtype(x.dtype).itemsize
    cost = pl.CostEstimate(
        flops=4 * B * L * D,                      # sub, square, two reductions
        transcendentals=B * D,                    # sqrt per output feature
        bytes_accessed=B * L * D * itemsize + B * 2 * D * itemsize,
    )

    # TODO(synk): for very large L (block >> VMEM) add an L grid axis with
    # running-sum accumulators; unnecessary at these shapes.
    return pl.pallas_call(
        kernel,
        out_shape=jax.ShapeDtypeStruct((B, 2 * D), x.dtype),
        grid_spec=pltpu.PrefetchScalarGridSpec(
            num_scalar_prefetch=0,
            grid=(B // block_b,),
            in_specs=[
                pl.BlockSpec((block_b, L, D), lambda i: (i, 0, 0)),
            ],
            out_specs=pl.BlockSpec((block_b, 2 * D), lambda i: (i, 0)),
        ),
        compiler_params=pltpu.CompilerParams(
            dimension_semantics=("parallel",),
        ),
        cost_estimate=cost,
    )(x)


def stats_pool_reference(x, *, floor=1e-10, bessel=False):
    means = jnp.mean(x, axis=1)
    t = x.shape[1] - 1 if bessel else x.shape[1]
    resid = x - means[:, None, :]
    numerator = jnp.sum(resid ** 2, axis=1)
    stds = jnp.sqrt(jnp.maximum(numerator, floor) / t)
    return jnp.concatenate([means, stds], axis=1)


if __name__ == "__main__":
    B, L, D = 2, 8, 32
    key = jax.random.PRNGKey(0)
    x = jax.random.normal(key, (B, L, D), dtype=jnp.float32)

    out = stats_pool_forward(x, floor=1e-10, bessel=False)
    out = jax.block_until_ready(out)

    ref = stats_pool_reference(x, floor=1e-10, bessel=False)
    assert out.shape == (B, 2 * D)
    assert jnp.allclose(out, ref, atol=1e-5, rtol=1e-5), "mismatch vs reference"
    print("KERNEL_OK")
</pallas_src>

<mosaic_0001>
module attributes {stable_mosaic.version = 11 : i64} {
  func.func @stats_pool_kernel(%arg0: i32, %arg1: memref<2x8x32xf32, #tpu.memory_space<vmem>>, %arg2: memref<2x64xf32, #tpu.memory_space<vmem>>) attributes {dimension_semantics = [#tpu.dimension_semantics<parallel>], iteration_bounds = array<i64: 1>, scalar_prefetch = 0 : i64, scratch_operands = 0 : i64, tpu.core_type = #tpu.core_type<tc>, window_params = [{transform_indices = @transform_0, window_bounds = array<i64: 2, 8, 32>}, {transform_indices = @transform_1, window_bounds = array<i64: 2, 64>}]} {
    %c0 = arith.constant 0 : index
    %c0_0 = arith.constant 0 : index
    %c0_1 = arith.constant 0 : index
    %0 = vector.load %arg1[%c0, %c0_0, %c0_1] : memref<2x8x32xf32, #tpu.memory_space<vmem>>, vector<2x8x32xf32>
    %cst = arith.constant dense<0.000000e+00> : vector<2x32xf32>
    %1 = vector.multi_reduction <add>, %0, %cst [1] : vector<2x8x32xf32> to vector<2x32xf32>
    %cst_2 = arith.constant 8.000000e+00 : f32
    %2 = vector.broadcast %cst_2 : f32 to vector<2x32xf32>
    %3 = arith.divf %1, %2 : vector<2x32xf32>
    %4 = vector.shape_cast %3 : vector<2x32xf32> to vector<2x1x32xf32>
    %5 = vector.broadcast %4 : vector<2x1x32xf32> to vector<2x8x32xf32>
    %6 = arith.subf %0, %5 : vector<2x8x32xf32>
    %7 = arith.mulf %6, %6 : vector<2x8x32xf32>
    %cst_3 = arith.constant dense<0.000000e+00> : vector<2x32xf32>
    %8 = vector.multi_reduction <add>, %7, %cst_3 [1] : vector<2x8x32xf32> to vector<2x32xf32>
    %cst_4 = arith.constant 1.000000e-10 : f32
    %9 = vector.broadcast %cst_4 : f32 to vector<2x32xf32>
    %10 = arith.maximumf %8, %9 : vector<2x32xf32>
    %cst_5 = arith.constant 1.250000e-01 : f32
    %11 = vector.broadcast %cst_5 : f32 to vector<2x32xf32>
    %12 = arith.mulf %10, %11 : vector<2x32xf32>
    %13 = math.sqrt %12 : vector<2x32xf32>
    %14 = tpu.concatenate %3, %13 in 1 : vector<2x32xf32>, vector<2x32xf32> -> vector<2x64xf32>
    %c0_6 = arith.constant 0 : index
    %c0_7 = arith.constant 0 : index
    %15 = vector.load %arg2[%c0_6, %c0_7] : memref<2x64xf32, #tpu.memory_space<vmem>>, vector<2x64xf32>
    tpu.vector_store %arg2[%c0_6, %c0_7], %14 {strides = array<i32>} : memref<2x64xf32, #tpu.memory_space<vmem>>, vector<2x64xf32>,
    return
  }
  func.func @transform_0(%arg0: i32) -> (i32, i32, i32) {
    %c0_i32 = arith.constant 0 : i32
    %c0_i32_0 = arith.constant 0 : i32
    %c0_i32_1 = arith.constant 0 : i32
    return %arg0, %c0_i32, %c0_i32_0 : i32, i32, i32
  }
  func.func @transform_1(%arg0: i32) -> (i32, i32) {
    %c0_i32 = arith.constant 0 : i32
    %c0_i32_0 = arith.constant 0 : i32
    return %arg0, %c0_i32 : i32, i32
  }
}

</mosaic_0001>

<llo_original>
// kernel: tpu_custom_call.1
$region0: #{tpu_custom_call.1}
  #allocation0 [shape = 'u32[]', space=smem, size = 0x4, offset = 0x4, fixed_abs, tag = 'smem constant byte address 0x4 - core index']
  #allocation1 [shape = 'u32[72,128]{1,0:T(1,128)}', space=vmem, size = 0x9000, scoped, tag = 'internal scratch']
  %s0 = inlined_call_operand.hbm [shape: f32[2,8,32], index: 0, kind: input, shape index: {}]
  %s1 = inlined_call_operand.hbm [shape: f32[2,64], index: 1, kind: output, shape index: {}]
  %s2 = sld [smem:[#allocation0]]
  $region18: #{tpu_custom_call.1} parent=0
    _
  %s4 = ssub.s32 1, %s2
  %s5 = scalar_select 0, %s4, %s2
  $region1: #{tpu_custom_call.1} parent=0
    #allocation2 [shape = 'u8[8192]{0}', space=vmem, size = 0x2000, scoped, tag = 'input window, operand 0, single buffered']
    #allocation3 [shape = 's32[1]{0}', space=sflag, size = 0x4, scoped, tag = 'scoped memory for tpu_custom_call.1']
    #allocation4 [shape = 's32[1]{0}', space=sflag, size = 0x4, scoped, tag = 'scoped memory for tpu_custom_call.1']
    #allocation5 [shape = 'u8[1024]{0}', space=vmem, size = 0x400, scoped, tag = 'output window, operand 0, single buffered']
    %6 = vsyncpa [#allocation3], 0
    %7 = vsyncpa [#allocation4], 0
    // Predicated region
    $region2: #{tpu_custom_call.1} parent=1 // pred_check
      _
    $region3: #{tpu_custom_call.1} parent=1 // pred_check_branch
      %9 = sbr.rel (0) target = $region5
    $region4: #{tpu_custom_call.1} parent=1 // pred_region
      %11 = vsyncadd [#allocation3], 0
      %s12 = sshll.u32 %s0, 4
      %s13 = int_to_ptr.hbm [resolvable:$true] %s12
      %s14 = sshll.u32 [#allocation2], 4
      %s15 = int_to_ptr.vmem [resolvable:$true] %s14
      %20 = dma.hbm_to_vmem [thread:$0]  %s13, 256, %s15, [#allocation3], 128, 128, 8
    $region5: #{tpu_custom_call.1} parent=1 // pred_fallthru
      _
    // Predicated region
    $region6: #{tpu_custom_call.1} parent=1 // pred_check
      _
    $region7: #{tpu_custom_call.1} parent=1 // pred_check_branch
      %22 = sbr.rel (0) target = $region9
    $region8: #{tpu_custom_call.1} parent=1 // pred_region
      %24 = dma.done [#allocation3], 256
    $region9: #{tpu_custom_call.1} parent=1 // pred_fallthru
      _
    %v25 = vld [vmem:[#allocation2] sm:$0xff]
    %v26 = vld [vmem:[#allocation2 + $0x8] sm:$0xff]
    %vm27 = vcmask 261120
    %v28 = vsel %vm27, %v25, 0.0
    %v29 = vrot.slane %v28, 4
    %v30 = vadd.f32 %v28, %v29
    %v31 = vrot.slane %v30, 2
    %v32 = vadd.f32 %v30, %v31
    %v33 = vrot.slane %v32, 1
    %v34 = vadd.f32 %v32, %v33
    %v35 = vsel %vm27, %v26, 0.0
    %v36 = vrot.slane %v35, 4
    %v37 = vadd.f32 %v35, %v36
    %v38 = vrot.slane %v37, 2
    %v39 = vadd.f32 %v37, %v38
    %v40 = vrot.slane %v39, 1
    %v41 = vadd.f32 %v39, %v40
    %v42 = vrcp.pop 8.0
    %v43 = vmul.f32 8.0, %v42
    %v44 = vsub.f32 1.0, %v43
    %v45 = vmul.f32 %v42, %v44
    %v46 = vadd.f32 %v42, %v45
    %vm47 = vweird.f32 %v42
    %v48 = vsel %vm47, %v42, %v46
    %v49 = vmul.f32 %v34, %v48
    %v50 = vmul.f32 %v41, %v48
    %v51 = vsub.f32 %v25, %v49
    %v52 = vsub.f32 %v26, %v50
    %v53 = vmul.f32 %v51, %v51
    %v54 = vmul.f32 %v52, %v52
    %v55 = vsel %vm27, %v53, 0.0
    %v56 = vrot.slane %v55, 4
    %v57 = vadd.f32 %v55, %v56
    %v58 = vrot.slane %v57, 2
    %v59 = vadd.f32 %v57, %v58
    %v60 = vrot.slane %v59, 1
    %v61 = vadd.f32 %v59, %v60
    %v62 = vsel %vm27, %v54, 0.0
    %v63 = vrot.slane %v62, 4
    %v64 = vadd.f32 %v62, %v63
    %v65 = vrot.slane %v64, 2
    %v66 = vadd.f32 %v64, %v65
    %v67 = vrot.slane %v66, 1
    %v68 = vadd.f32 %v66, %v67
    %v69 = vmax.f32 %v61, 1e-10
    %v70 = vmax.f32 %v68, 1e-10
    %v71 = vmul.f32 %v69, 0.125
    %v72 = vmul.f32 %v70, 0.125
    %v73 = vrsqrt.pop %v71
    %v74 = vmul.f32 %v73, %v71
    %v75 = vmul.f32 %v74, %v73
    %v76 = vmul.f32 0.5, %v75
    %v77 = vsub.f32 1.5, %v76
    %v78 = vmul.f32 %v73, %v77
    %v79 = vmul.f32 %v71, %v78
    %vm80 = vcmp.eq.f32.partialorder %v71, inf
    %v81 = vsel %vm80, %v71, %v79
    %vm82 = vcmp.eq.f32.partialorder %v71, 0.0
    %v83 = vand.u32 %v71, 2147483648
    %v84 = vsel %vm82, %v83, %v81
    %v85 = vrsqrt.pop %v72
    %v86 = vmul.f32 %v85, %v72
    %v87 = vmul.f32 %v86, %v85
    %v88 = vmul.f32 0.5, %v87
    %v89 = vsub.f32 1.5, %v88
    %v90 = vmul.f32 %v85, %v89
    %v91 = vmul.f32 %v72, %v90
    %vm92 = vcmp.eq.f32.partialorder %v72, inf
    %v93 = vsel %vm92, %v72, %v91
    %vm94 = vcmp.eq.f32.partialorder %v72, 0.0
    %v95 = vand.u32 %v72, 2147483648
    %v96 = vsel %vm94, %v95, %v93
    %vm99 = vcmask 1041409
    %v100 = vsel %vm99, %v50, %v49
    %v104 = vsel %vm99, %v96, %v84
    %105 = vrot.lane.b32.xlu0 %v104, 32
    %v106 = vpop.permute.xlu0 %105
    %v108 = vsel %vm27, %v100, %v106
    %vm109 = vcmask 517120
    %110 = vst.msk [vmem:[#allocation5] sm:$0x3] %vm109, %v108
    // Predicated region
    $region10: #{tpu_custom_call.1} parent=1 // pred_check
      _
    $region11: #{tpu_custom_call.1} parent=1 // pred_check_branch
      %112 = sbr.rel (0) target = $region13
    $region12: #{tpu_custom_call.1} parent=1 // pred_region
      %114 = vsyncadd [#allocation4], 0
      %s116 = sshll.u32 [#allocation5], 4
      %s117 = int_to_ptr.vmem [resolvable:$true] %s116
      %s118 = sshll.u32 %s1, 4
      %s119 = int_to_ptr.hbm [resolvable:$true] %s118
      %121 = dma.vmem_to_hbm [thread:$0]  %s117, 32, %s119, [#allocation4]
    $region13: #{tpu_custom_call.1} parent=1 // pred_fallthru
      _
    // Predicated region
    $region14: #{tpu_custom_call.1} parent=1 // pred_check
      _
    $region15: #{tpu_custom_call.1} parent=1 // pred_check_branch
      %123 = sbr.rel (0) target = $region17
    $region16: #{tpu_custom_call.1} parent=1 // pred_region
      %125 = dma.done [#allocation4], 32
    $region17: #{tpu_custom_call.1} parent=1 // pred_fallthru
      _
    %126 = vsyncpa [#allocation3], 1
    %127 = vsyncpa [#allocation4], 1

</llo_original>
